<compile_context>
chip_gen: v6e
topology: v6e:2x2x1
jax: 0.10.0
libtpu: 0.0.40
codegen_flags: <defaults>
</compile_context>

<pallas_src>
import jax
import jax.numpy as jnp
from jax.experimental import pallas as pl
from jax.experimental.pallas import tpu as pltpu


IN_FEATS = 1433
HIDDEN = 16
OUT_FEATS = 7

LANE = 128
IN_FEATS_PAD = ((IN_FEATS + LANE - 1) // LANE) * LANE   # 1536
OUT_FEATS_PAD = LANE                                    # 128 (lane-dense output slab)
SLAB_ROWS = HIDDEN + 2                                  # 16 rows W2, 1 row b2, 1 row b1


def _fused_gcn_kernel(a_ref, x_ref, w1_ref, p_ref, o_ref):
    """out = A @ (relu(A @ (X @ W1) + b1) @ W2) + b2 — single kernel, h stays in VMEM."""
    a = a_ref[...]                                                     # (N, N) bf16
    params = p_ref[...]                                                # (18, 128) f32
    w2 = params[0:HIDDEN, :].astype(jnp.bfloat16)                      # (16, 128) bf16 for MXU
    b2 = params[HIDDEN:HIDDEN + 1, :]                                  # (1, 128) f32
    b1 = params[HIDDEN + 1:HIDDEN + 2, :HIDDEN]                        # (1, 16)  f32

    # ---- layer 1: GraphConv(1433 -> 16) + ReLU ------------------------------
    # bf16 operands on the MXU, f32 accumulation.
    xw = jnp.dot(x_ref[...], w1_ref[...], preferred_element_type=jnp.float32)   # (N, 16) f32
    h = jnp.dot(a, xw.astype(jnp.bfloat16), preferred_element_type=jnp.float32) + b1
    h = jnp.maximum(h, 0.0)                                            # relu (idempotent w/ outer F.relu)

    # ---- layer 2: GraphConv(16 -> 7), no activation --------------------------
    hw = jnp.dot(h.astype(jnp.bfloat16), w2, preferred_element_type=jnp.float32)  # (N, 128) f32
    out = jnp.dot(a, hw.astype(jnp.bfloat16), preferred_element_type=jnp.float32) + b2

    o_ref[...] = out.astype(o_ref.dtype)                               # lane-dense (N, 128) store


def _vmem_limit_bytes(n):
    """Scoped-VMEM budget from the actual operand footprint (+2x headroom, <=64 MiB)."""
    a_b = n * n * 2                                   # bf16 A_hat
    x_b = n * IN_FEATS_PAD * 2                        # bf16 X
    w1_b = IN_FEATS_PAD * HIDDEN * 2                  # bf16 W1
    slab_b = SLAB_ROWS * OUT_FEATS_PAD * 4            # f32 param slab
    out_b = n * OUT_FEATS_PAD * 4                     # f32 output slab
    temps = n * HIDDEN * 4 * 4 + n * OUT_FEATS_PAD * 4 * 2   # xw/h/hw f32 + bf16 copies
    total = a_b + x_b + w1_b + slab_b + out_b + temps
    return int(min(64 * 1024 * 1024, max(8 * 1024 * 1024, 2 * total)))


def net_forward(a_hat_bf16, x_padded, padded_params):
    """Fused forward. a_hat_bf16: (N,N) bf16; x_padded: (N,1536) bf16; returns (N,7) f32."""
    w1p, param_slab = padded_params
    n = a_hat_bf16.shape[0]
    vmem_spec = pl.BlockSpec(memory_space=pltpu.MemorySpace.VMEM)
    out_padded = pl.pallas_call(
        _fused_gcn_kernel,
        out_shape=jax.ShapeDtypeStruct((n, OUT_FEATS_PAD), jnp.float32),
        in_specs=[vmem_spec] * 4,
        out_specs=vmem_spec,
        compiler_params=pltpu.CompilerParams(vmem_limit_bytes=_vmem_limit_bytes(n)),
    )(a_hat_bf16, x_padded, w1p, param_slab)
    return out_padded[:, :OUT_FEATS]


def pad_features(features):
    """(N, 1433) f32 -> (N, 1536) bf16, zero-padded tail (contributes 0 to X@W1)."""
    n, f = features.shape
    x = jnp.zeros((n, IN_FEATS_PAD), jnp.bfloat16)
    return x.at[:, :f].set(features.astype(jnp.bfloat16))


def pad_params(w1, b1, w2, b2):
    """Pad/cast weights once on the host: bf16 W1, plus one (18,128) f32 slab for W2/b2/b1."""
    w1p = jnp.zeros((IN_FEATS_PAD, HIDDEN), jnp.bfloat16)
    w1p = w1p.at[:IN_FEATS, :].set(w1.astype(jnp.bfloat16))

    slab = jnp.zeros((SLAB_ROWS, OUT_FEATS_PAD), jnp.float32)
    slab = slab.at[:HIDDEN, :OUT_FEATS].set(w2.astype(jnp.float32))              # W2 rows 0..15
    slab = slab.at[HIDDEN, :OUT_FEATS].set(b2.reshape(-1).astype(jnp.float32))   # b2 row 16
    slab = slab.at[HIDDEN + 1, :HIDDEN].set(b1.reshape(-1).astype(jnp.float32))  # b1 row 17
    return (w1p, slab)


def build_normalized_adjacency(key, n):
    """Deterministic random undirected graph with self-loops, GCN 'both' norm (f32)."""
    r = jax.random.uniform(key, (n, n))
    adj = (r + r.T) * 0.5 > 0.7                      # symmetric random edges
    adj = adj.astype(jnp.float32)
    adj = adj + jnp.eye(n, dtype=jnp.float32)        # self loops
    adj = jnp.minimum(adj, 1.0)
    deg = jnp.sum(adj, axis=1)
    d_inv_sqrt = 1.0 / jnp.sqrt(jnp.maximum(deg, 1.0))
    return adj * d_inv_sqrt[:, None] * d_inv_sqrt[None, :]


def init_params(key):
    """Glorot-uniform weights, zero biases (deterministic), matching module shapes."""
    k1, k2 = jax.random.split(key)

    def glorot(k, fan_in, fan_out):
        limit = jnp.sqrt(6.0 / (fan_in + fan_out))
        return jax.random.uniform(k, (fan_in, fan_out), jnp.float32, -limit, limit)

    w1 = glorot(k1, IN_FEATS, HIDDEN)
    b1 = jnp.zeros((1, HIDDEN), jnp.float32)
    w2 = glorot(k2, HIDDEN, OUT_FEATS)
    b2 = jnp.zeros((1, OUT_FEATS), jnp.float32)
    return (w1, b1, w2, b2)


if __name__ == "__main__":
    key = jax.random.PRNGKey(0)
    k_graph, k_feat, k_param = jax.random.split(key, 3)

    n_nodes = 32                       # small synthetic graph
    a_hat = build_normalized_adjacency(k_graph, n_nodes).astype(jnp.bfloat16)
    features = jax.random.normal(k_feat, (n_nodes, IN_FEATS), jnp.float32)
    w1, b1, w2, b2 = init_params(k_param)

    # Host-side, one-time padding / bf16 cast (kept padded for repeated calls).
    x_padded = pad_features(features)
    padded_params = pad_params(w1, b1, w2, b2)

    out = net_forward(a_hat, x_padded, padded_params)
    out = jax.block_until_ready(out)

    assert out.shape == (n_nodes, OUT_FEATS)
    assert jnp.all(jnp.isfinite(out))
    print("KERNEL_OK")
</pallas_src>

<mosaic_0001>
module attributes {stable_mosaic.version = 11 : i64} {
  func.func @_fused_gcn_kernel(%arg0: memref<32x32xbf16, #tpu.memory_space<vmem>>, %arg1: memref<32x1536xbf16, #tpu.memory_space<vmem>>, %arg2: memref<1536x16xbf16, #tpu.memory_space<vmem>>, %arg3: memref<18x128xf32, #tpu.memory_space<vmem>>, %arg4: memref<32x128xf32, #tpu.memory_space<vmem>>) attributes {dimension_semantics = [], scalar_prefetch = 0 : i64, scratch_operands = 0 : i64, tpu.core_type = #tpu.core_type<tc>} {
    %c0 = arith.constant 0 : index
    %c0_0 = arith.constant 0 : index
    %0 = vector.load %arg0[%c0, %c0_0] : memref<32x32xbf16, #tpu.memory_space<vmem>>, vector<32x32xbf16>
    %c0_1 = arith.constant 0 : index
    %c0_2 = arith.constant 0 : index
    %1 = vector.load %arg3[%c0_1, %c0_2] : memref<18x128xf32, #tpu.memory_space<vmem>>, vector<18x128xf32>
    %2 = vector.extract_strided_slice %1 {offsets = [0, 0], sizes = [16, 128], strides = [1, 1]} : vector<18x128xf32> to vector<16x128xf32>
    %3 = arith.truncf %2 : vector<16x128xf32> to vector<16x128xbf16>
    %4 = vector.extract_strided_slice %1 {offsets = [16, 0], sizes = [1, 128], strides = [1, 1]} : vector<18x128xf32> to vector<1x128xf32>
    %5 = vector.extract_strided_slice %1 {offsets = [17, 0], sizes = [1, 16], strides = [1, 1]} : vector<18x128xf32> to vector<1x16xf32>
    %c0_3 = arith.constant 0 : index
    %c0_4 = arith.constant 0 : index
    %6 = vector.load %arg1[%c0_3, %c0_4] : memref<32x1536xbf16, #tpu.memory_space<vmem>>, vector<32x1536xbf16>
    %c0_5 = arith.constant 0 : index
    %c0_6 = arith.constant 0 : index
    %7 = vector.load %arg2[%c0_5, %c0_6] : memref<1536x16xbf16, #tpu.memory_space<vmem>>, vector<1536x16xbf16>
    %cst = arith.constant dense<0.000000e+00> : vector<32x16xf32>
    %8 = tpu.matmul %6, %7, %cst {dimension_numbers = #tpu.dot_dimension_numbers<[1], [0], [0], [1], [0, 0, 1, 1], [], []>} : vector<32x1536xbf16>, vector<1536x16xbf16>, vector<32x16xf32> -> vector<32x16xf32>
    %9 = arith.truncf %8 : vector<32x16xf32> to vector<32x16xbf16>
    %cst_7 = arith.constant dense<0.000000e+00> : vector<32x16xf32>
    %10 = tpu.matmul %0, %9, %cst_7 {dimension_numbers = #tpu.dot_dimension_numbers<[1], [0], [0], [1], [0, 0, 1, 1], [], []>} : vector<32x32xbf16>, vector<32x16xbf16>, vector<32x16xf32> -> vector<32x16xf32>
    %11 = vector.broadcast %5 : vector<1x16xf32> to vector<32x16xf32>
    %12 = arith.addf %10, %11 : vector<32x16xf32>
    %cst_8 = arith.constant 0.000000e+00 : f32
    %13 = vector.broadcast %cst_8 : f32 to vector<32x16xf32>
    %14 = arith.maximumf %12, %13 : vector<32x16xf32>
    %15 = arith.truncf %14 : vector<32x16xf32> to vector<32x16xbf16>
    %cst_9 = arith.constant dense<0.000000e+00> : vector<32x128xf32>
    %16 = tpu.matmul %15, %3, %cst_9 {dimension_numbers = #tpu.dot_dimension_numbers<[1], [0], [0], [1], [0, 0, 1, 1], [], []>} : vector<32x16xbf16>, vector<16x128xbf16>, vector<32x128xf32> -> vector<32x128xf32>
    %17 = arith.truncf %16 : vector<32x128xf32> to vector<32x128xbf16>
    %cst_10 = arith.constant dense<0.000000e+00> : vector<32x128xf32>
    %18 = tpu.matmul %0, %17, %cst_10 {dimension_numbers = #tpu.dot_dimension_numbers<[1], [0], [0], [1], [0, 0, 1, 1], [], []>} : vector<32x32xbf16>, vector<32x128xbf16>, vector<32x128xf32> -> vector<32x128xf32>
    %19 = vector.broadcast %4 : vector<1x128xf32> to vector<32x128xf32>
    %20 = arith.addf %18, %19 : vector<32x128xf32>
    %c0_11 = arith.constant 0 : index
    %c0_12 = arith.constant 0 : index
    %21 = vector.load %arg4[%c0_11, %c0_12] : memref<32x128xf32, #tpu.memory_space<vmem>>, vector<32x128xf32>
    tpu.vector_store %arg4[%c0_11, %c0_12], %20 {strides = array<i32>} : memref<32x128xf32, #tpu.memory_space<vmem>>, vector<32x128xf32>,
    return
  }
}

</mosaic_0001>

<llo_original>
// kernel: tpu_custom_call.1
$region0: #{tpu_custom_call.1}
  #allocation0 [shape = 'u32[]', space=smem, size = 0x4, offset = 0x4, fixed_abs, tag = 'smem constant byte address 0x4 - core index']
  #allocation1 [shape = 'u32[144,128]{1,0:T(1,128)}', space=vmem, size = 0x12000, scoped, tag = 'internal scratch']
  %s0 = inlined_call_operand.vmem [shape: bf16[32,32], index: 0, kind: input, shape index: {}]
  %s1 = inlined_call_operand.vmem [shape: bf16[32,1536], index: 1, kind: input, shape index: {}]
  %s2 = inlined_call_operand.vmem [shape: bf16[1536,16], index: 2, kind: input, shape index: {}]
  %s3 = inlined_call_operand.vmem [shape: f32[18,128], index: 3, kind: input, shape index: {}]
  %s4 = inlined_call_operand.hbm [shape: f32[32,128], index: 4, kind: output, shape index: {}]
  %s5 = sld [smem:[#allocation0]]
  $region26: #{tpu_custom_call.1} parent=0
    _
  %s7 = ssub.s32 1, %s5
  %s8 = scalar_select 0, %s7, %s5
  $region1: #{tpu_custom_call.1} parent=0
    #allocation2 [shape = 'u8[16384]{0}', space=vmem, size = 0x4000, scoped, tag = 'output window, operand 0, single buffered']
    #allocation3 [shape = 's32[1]{0}', space=sflag, size = 0x4, scoped, tag = 'scoped memory for tpu_custom_call.1']
    %9 = vsyncpa [#allocation3], 0
    // Predicated region
    $region2: #{tpu_custom_call.1} parent=1 // pred_check
      _
    $region3: #{tpu_custom_call.1} parent=1 // pred_check_branch
      %11 = sbr.rel (0) target = $region5
    $region4: #{tpu_custom_call.1} parent=1 // pred_region
      _
    $region5: #{tpu_custom_call.1} parent=1 // pred_fallthru
      _
    // Predicated region
    $region6: #{tpu_custom_call.1} parent=1 // pred_check
      _
    $region7: #{tpu_custom_call.1} parent=1 // pred_check_branch
      %13 = sbr.rel (0) target = $region9
    $region8: #{tpu_custom_call.1} parent=1 // pred_region
      _
    $region9: #{tpu_custom_call.1} parent=1 // pred_fallthru
      _
    // Predicated region
    $region10: #{tpu_custom_call.1} parent=1 // pred_check
      _
    $region11: #{tpu_custom_call.1} parent=1 // pred_check_branch
      %15 = sbr.rel (0) target = $region13
    $region12: #{tpu_custom_call.1} parent=1 // pred_region
      _
    $region13: #{tpu_custom_call.1} parent=1 // pred_fallthru
      _
    // Predicated region
    $region14: #{tpu_custom_call.1} parent=1 // pred_check
      _
    $region15: #{tpu_custom_call.1} parent=1 // pred_check_branch
      %17 = sbr.rel (0) target = $region17
    $region16: #{tpu_custom_call.1} parent=1 // pred_region
      _
    $region17: #{tpu_custom_call.1} parent=1 // pred_fallthru
      _
    %v19 = vld [vmem:[%s0] sm:$0xf]
    %v20 = vld [vmem:[%s0 + $0x4] sm:$0xf]
    %v21 = vld [vmem:[%s0 + $0x8] sm:$0xf]
    %v22 = vld [vmem:[%s0 + $0xc] sm:$0xf]
    %v23 = vld [vmem:[%s3] sm:$0xff]
    %v24 = vld [vmem:[%s3 + $0x8] sm:$0xff]
    %v25 = vld [vmem:[%s3 + $0x10] sm:$0x3]
    %v26 = vpack.c.bf16 %v24, %v23
    %v27 = vld [vmem:[%s1] sm:$0xff]
    %v28 = vld [vmem:[%s1 + $0x8] sm:$0xff]
    %v29 = vld [vmem:[%s1 + $0x10] sm:$0xff]
    %v30 = vld [vmem:[%s1 + $0x18] sm:$0xff]
    %v31 = vld [vmem:[%s1 + $0x20] sm:$0xff]
    %v32 = vld [vmem:[%s1 + $0x28] sm:$0xff]
    %v33 = vld [vmem:[%s1 + $0x30] sm:$0xff]
    %v34 = vld [vmem:[%s1 + $0x38] sm:$0xff]
    %v35 = vld [vmem:[%s1 + $0x40] sm:$0xff]
    %v36 = vld [vmem:[%s1 + $0x48] sm:$0xff]
    %v37 = vld [vmem:[%s1 + $0x50] sm:$0xff]
    %v38 = vld [vmem:[%s1 + $0x58] sm:$0xff]
    %v39 = vld [vmem:[%s1 + $0x60] sm:$0xff]
    %v40 = vld [vmem:[%s1 + $0x68] sm:$0xff]
    %v41 = vld [vmem:[%s1 + $0x70] sm:$0xff]
    %v42 = vld [vmem:[%s1 + $0x78] sm:$0xff]
    %v43 = vld [vmem:[%s1 + $0x80] sm:$0xff]
    %v44 = vld [vmem:[%s1 + $0x88] sm:$0xff]
    %v45 = vld [vmem:[%s1 + $0x90] sm:$0xff]
    %v46 = vld [vmem:[%s1 + $0x98] sm:$0xff]
    %v47 = vld [vmem:[%s1 + $0xa0] sm:$0xff]
    %v48 = vld [vmem:[%s1 + $0xa8] sm:$0xff]
    %v49 = vld [vmem:[%s1 + $0xb0] sm:$0xff]
    %v50 = vld [vmem:[%s1 + $0xb8] sm:$0xff]
    %v51 = vld [vmem:[%s2] sm:$0xf]
    %v52 = vld [vmem:[%s2 + $0x4] sm:$0xf]
    %v53 = vld [vmem:[%s2 + $0x8] sm:$0xf]
    %v54 = vld [vmem:[%s2 + $0xc] sm:$0xf]
    %v55 = vld [vmem:[%s2 + $0x10] sm:$0xf]
    %v56 = vld [vmem:[%s2 + $0x14] sm:$0xf]
    %v57 = vld [vmem:[%s2 + $0x18] sm:$0xf]
    %v58 = vld [vmem:[%s2 + $0x1c] sm:$0xf]
    %v59 = vld [vmem:[%s2 + $0x20] sm:$0xf]
    %v60 = vld [vmem:[%s2 + $0x24] sm:$0xf]
    %v61 = vld [vmem:[%s2 + $0x28] sm:$0xf]
    %v62 = vld [vmem:[%s2 + $0x2c] sm:$0xf]
    %v63 = vld [vmem:[%s2 + $0x30] sm:$0xf]
    %v64 = vld [vmem:[%s2 + $0x34] sm:$0xf]
    %v65 = vld [vmem:[%s2 + $0x38] sm:$0xf]
    %v66 = vld [vmem:[%s2 + $0x3c] sm:$0xf]
    %v67 = vld [vmem:[%s2 + $0x40] sm:$0xf]
    %v68 = vld [vmem:[%s2 + $0x44] sm:$0xf]
    %v69 = vld [vmem:[%s2 + $0x48] sm:$0xf]
    %v70 = vld [vmem:[%s2 + $0x4c] sm:$0xf]
    %v71 = vld [vmem:[%s2 + $0x50] sm:$0xf]
    %v72 = vld [vmem:[%s2 + $0x54] sm:$0xf]
    %v73 = vld [vmem:[%s2 + $0x58] sm:$0xf]
    %v74 = vld [vmem:[%s2 + $0x5c] sm:$0xf]
    %v75 = vld [vmem:[%s2 + $0x60] sm:$0xf]
    %v76 = vld [vmem:[%s2 + $0x64] sm:$0xf]
    %v77 = vld [vmem:[%s2 + $0x68] sm:$0xf]
    %v78 = vld [vmem:[%s2 + $0x6c] sm:$0xf]
    %v79 = vld [vmem:[%s2 + $0x70] sm:$0xf]
    %v80 = vld [vmem:[%s2 + $0x74] sm:$0xf]
    %v81 = vld [vmem:[%s2 + $0x78] sm:$0xf]
    %v82 = vld [vmem:[%s2 + $0x7c] sm:$0xf]
    %v83 = vld [vmem:[%s2 + $0x80] sm:$0xf]
    %v84 = vld [vmem:[%s2 + $0x84] sm:$0xf]
    %v85 = vld [vmem:[%s2 + $0x88] sm:$0xf]
    %v86 = vld [vmem:[%s2 + $0x8c] sm:$0xf]
    %v87 = vld [vmem:[%s2 + $0x90] sm:$0xf]
    %v88 = vld [vmem:[%s2 + $0x94] sm:$0xf]
    %v89 = vld [vmem:[%s2 + $0x98] sm:$0xf]
    %v90 = vld [vmem:[%s2 + $0x9c] sm:$0xf]
    %v91 = vld [vmem:[%s2 + $0xa0] sm:$0xf]
    %v92 = vld [vmem:[%s2 + $0xa4] sm:$0xf]
    %v93 = vld [vmem:[%s2 + $0xa8] sm:$0xf]
    %v94 = vld [vmem:[%s2 + $0xac] sm:$0xf]
    %v95 = vld [vmem:[%s2 + $0xb0] sm:$0xf]
    %v96 = vld [vmem:[%s2 + $0xb4] sm:$0xf]
    %v97 = vld [vmem:[%s2 + $0xb8] sm:$0xf]
    %v98 = vld [vmem:[%s2 + $0xbc] sm:$0xf]
    %v99 = vld [vmem:[%s2 + $0xc0] sm:$0xf]
    %v100 = vld [vmem:[%s2 + $0xc4] sm:$0xf]
    %v101 = vld [vmem:[%s2 + $0xc8] sm:$0xf]
    %v102 = vld [vmem:[%s2 + $0xcc] sm:$0xf]
    %v103 = vld [vmem:[%s2 + $0xd0] sm:$0xf]
    %v104 = vld [vmem:[%s2 + $0xd4] sm:$0xf]
    %v105 = vld [vmem:[%s2 + $0xd8] sm:$0xf]
    %v106 = vld [vmem:[%s2 + $0xdc] sm:$0xf]
    %v107 = vld [vmem:[%s2 + $0xe0] sm:$0xf]
    %v108 = vld [vmem:[%s2 + $0xe4] sm:$0xf]
    %v109 = vld [vmem:[%s2 + $0xe8] sm:$0xf]
    %v110 = vld [vmem:[%s2 + $0xec] sm:$0xf]
    %v111 = vld [vmem:[%s2 + $0xf0] sm:$0xf]
    %v112 = vld [vmem:[%s2 + $0xf4] sm:$0xf]
    %v113 = vld [vmem:[%s2 + $0xf8] sm:$0xf]
    %v114 = vld [vmem:[%s2 + $0xfc] sm:$0xf]
    %v115 = vld [vmem:[%s2 + $0x100] sm:$0xf]
    %v116 = vld [vmem:[%s2 + $0x104] sm:$0xf]
    %v117 = vld [vmem:[%s2 + $0x108] sm:$0xf]
    %v118 = vld [vmem:[%s2 + $0x10c] sm:$0xf]
    %v119 = vld [vmem:[%s2 + $0x110] sm:$0xf]
    %v120 = vld [vmem:[%s2 + $0x114] sm:$0xf]
    %v121 = vld [vmem:[%s2 + $0x118] sm:$0xf]
    %v122 = vld [vmem:[%s2 + $0x11c] sm:$0xf]
    %v123 = vld [vmem:[%s2 + $0x120] sm:$0xf]
    %v124 = vld [vmem:[%s2 + $0x124] sm:$0xf]
    %v125 = vld [vmem:[%s2 + $0x128] sm:$0xf]
    %v126 = vld [vmem:[%s2 + $0x12c] sm:$0xf]
    %v127 = vld [vmem:[%s2 + $0x130] sm:$0xf]
    %v128 = vld [vmem:[%s2 + $0x134] sm:$0xf]
    %v129 = vld [vmem:[%s2 + $0x138] sm:$0xf]
    %v130 = vld [vmem:[%s2 + $0x13c] sm:$0xf]
    %v131 = vld [vmem:[%s2 + $0x140] sm:$0xf]
    %v132 = vld [vmem:[%s2 + $0x144] sm:$0xf]
    %v133 = vld [vmem:[%s2 + $0x148] sm:$0xf]
    %v134 = vld [vmem:[%s2 + $0x14c] sm:$0xf]
    %v135 = vld [vmem:[%s2 + $0x150] sm:$0xf]
    %v136 = vld [vmem:[%s2 + $0x154] sm:$0xf]
    %v137 = vld [vmem:[%s2 + $0x158] sm:$0xf]
    %v138 = vld [vmem:[%s2 + $0x15c] sm:$0xf]
    %v139 = vld [vmem:[%s2 + $0x160] sm:$0xf]
    %v140 = vld [vmem:[%s2 + $0x164] sm:$0xf]
    %v141 = vld [vmem:[%s2 + $0x168] sm:$0xf]
    %v142 = vld [vmem:[%s2 + $0x16c] sm:$0xf]
    %v143 = vld [vmem:[%s2 + $0x170] sm:$0xf]
    %v144 = vld [vmem:[%s2 + $0x174] sm:$0xf]
    %v145 = vld [vmem:[%s2 + $0x178] sm:$0xf]
    %v146 = vld [vmem:[%s2 + $0x17c] sm:$0xf]
    %v147 = vld [vmem:[%s2 + $0x180] sm:$0xf]
    %v148 = vld [vmem:[%s2 + $0x184] sm:$0xf]
    %v149 = vld [vmem:[%s2 + $0x188] sm:$0xf]
    %v150 = vld [vmem:[%s2 + $0x18c] sm:$0xf]
    %v151 = vld [vmem:[%s2 + $0x190] sm:$0xf]
    %v152 = vld [vmem:[%s2 + $0x194] sm:$0xf]
    %v153 = vld [vmem:[%s2 + $0x198] sm:$0xf]
    %v154 = vld [vmem:[%s2 + $0x19c] sm:$0xf]
    %v155 = vld [vmem:[%s2 + $0x1a0] sm:$0xf]
    %v156 = vld [vmem:[%s2 + $0x1a4] sm:$0xf]
    %v157 = vld [vmem:[%s2 + $0x1a8] sm:$0xf]
    %v158 = vld [vmem:[%s2 + $0x1ac] sm:$0xf]
    %v159 = vld [vmem:[%s2 + $0x1b0] sm:$0xf]
    %v160 = vld [vmem:[%s2 + $0x1b4] sm:$0xf]
    %v161 = vld [vmem:[%s2 + $0x1b8] sm:$0xf]
    %v162 = vld [vmem:[%s2 + $0x1bc] sm:$0xf]
    %v163 = vld [vmem:[%s2 + $0x1c0] sm:$0xf]
    %v164 = vld [vmem:[%s2 + $0x1c4] sm:$0xf]
    %v165 = vld [vmem:[%s2 + $0x1c8] sm:$0xf]
    %v166 = vld [vmem:[%s2 + $0x1cc] sm:$0xf]
    %v167 = vld [vmem:[%s2 + $0x1d0] sm:$0xf]
    %v168 = vld [vmem:[%s2 + $0x1d4] sm:$0xf]
    %v169 = vld [vmem:[%s2 + $0x1d8] sm:$0xf]
    %v170 = vld [vmem:[%s2 + $0x1dc] sm:$0xf]
    %v171 = vld [vmem:[%s2 + $0x1e0] sm:$0xf]
    %v172 = vld [vmem:[%s2 + $0x1e4] sm:$0xf]
    %v173 = vld [vmem:[%s2 + $0x1e8] sm:$0xf]
    %v174 = vld [vmem:[%s2 + $0x1ec] sm:$0xf]
    %v175 = vld [vmem:[%s2 + $0x1f0] sm:$0xf]
    %v176 = vld [vmem:[%s2 + $0x1f4] sm:$0xf]
    %v177 = vld [vmem:[%s2 + $0x1f8] sm:$0xf]
    %v178 = vld [vmem:[%s2 + $0x1fc] sm:$0xf]
    %v179 = vld [vmem:[%s2 + $0x200] sm:$0xf]
    %v180 = vld [vmem:[%s2 + $0x204] sm:$0xf]
    %v181 = vld [vmem:[%s2 + $0x208] sm:$0xf]
    %v182 = vld [vmem:[%s2 + $0x20c] sm:$0xf]
    %v183 = vld [vmem:[%s2 + $0x210] sm:$0xf]
    %v184 = vld [vmem:[%s2 + $0x214] sm:$0xf]
    %v185 = vld [vmem:[%s2 + $0x218] sm:$0xf]
    %v186 = vld [vmem:[%s2 + $0x21c] sm:$0xf]
    %v187 = vld [vmem:[%s2 + $0x220] sm:$0xf]
    %v188 = vld [vmem:[%s2 + $0x224] sm:$0xf]
    %v189 = vld [vmem:[%s2 + $0x228] sm:$0xf]
    %v190 = vld [vmem:[%s2 + $0x22c] sm:$0xf]
    %v191 = vld [vmem:[%s2 + $0x230] sm:$0xf]
    %v192 = vld [vmem:[%s2 + $0x234] sm:$0xf]
    %v193 = vld [vmem:[%s2 + $0x238] sm:$0xf]
    %v194 = vld [vmem:[%s2 + $0x23c] sm:$0xf]
    %v195 = vld [vmem:[%s2 + $0x240] sm:$0xf]
    %v196 = vld [vmem:[%s2 + $0x244] sm:$0xf]
    %v197 = vld [vmem:[%s2 + $0x248] sm:$0xf]
    %v198 = vld [vmem:[%s2 + $0x24c] sm:$0xf]
    %v199 = vld [vmem:[%s2 + $0x250] sm:$0xf]
    %v200 = vld [vmem:[%s2 + $0x254] sm:$0xf]
    %v201 = vld [vmem:[%s2 + $0x258] sm:$0xf]
    %v202 = vld [vmem:[%s2 + $0x25c] sm:$0xf]
    %v203 = vld [vmem:[%s2 + $0x260] sm:$0xf]
    %v204 = vld [vmem:[%s2 + $0x264] sm:$0xf]
    %v205 = vld [vmem:[%s2 + $0x268] sm:$0xf]
    %v206 = vld [vmem:[%s2 + $0x26c] sm:$0xf]
    %v207 = vld [vmem:[%s2 + $0x270] sm:$0xf]
    %v208 = vld [vmem:[%s2 + $0x274] sm:$0xf]
    %v209 = vld [vmem:[%s2 + $0x278] sm:$0xf]
    %v210 = vld [vmem:[%s2 + $0x27c] sm:$0xf]
    %v211 = vld [vmem:[%s2 + $0x280] sm:$0xf]
    %v212 = vld [vmem:[%s2 + $0x284] sm:$0xf]
    %v213 = vld [vmem:[%s2 + $0x288] sm:$0xf]
    %v214 = vld [vmem:[%s2 + $0x28c] sm:$0xf]
    %v215 = vld [vmem:[%s2 + $0x290] sm:$0xf]
    %v216 = vld [vmem:[%s2 + $0x294] sm:$0xf]
    %v217 = vld [vmem:[%s2 + $0x298] sm:$0xf]
    %v218 = vld [vmem:[%s2 + $0x29c] sm:$0xf]
    %v219 = vld [vmem:[%s2 + $0x2a0] sm:$0xf]
    %v220 = vld [vmem:[%s2 + $0x2a4] sm:$0xf]
    %v221 = vld [vmem:[%s2 + $0x2a8] sm:$0xf]
    %v222 = vld [vmem:[%s2 + $0x2ac] sm:$0xf]
    %v223 = vld [vmem:[%s2 + $0x2b0] sm:$0xf]
    %v224 = vld [vmem:[%s2 + $0x2b4] sm:$0xf]
    %v225 = vld [vmem:[%s2 + $0x2b8] sm:$0xf]
    %v226 = vld [vmem:[%s2 + $0x2bc] sm:$0xf]
    %v227 = vld [vmem:[%s2 + $0x2c0] sm:$0xf]
    %v228 = vld [vmem:[%s2 + $0x2c4] sm:$0xf]
    %v229 = vld [vmem:[%s2 + $0x2c8] sm:$0xf]
    %v230 = vld [vmem:[%s2 + $0x2cc] sm:$0xf]
    %v231 = vld [vmem:[%s2 + $0x2d0] sm:$0xf]
    %v232 = vld [vmem:[%s2 + $0x2d4] sm:$0xf]
    %v233 = vld [vmem:[%s2 + $0x2d8] sm:$0xf]
    %v234 = vld [vmem:[%s2 + $0x2dc] sm:$0xf]
    %v235 = vld [vmem:[%s2 + $0x2e0] sm:$0xf]
    %v236 = vld [vmem:[%s2 + $0x2e4] sm:$0xf]
    %v237 = vld [vmem:[%s2 + $0x2e8] sm:$0xf]
    %v238 = vld [vmem:[%s2 + $0x2ec] sm:$0xf]
    %v239 = vld [vmem:[%s2 + $0x2f0] sm:$0xf]
    %v240 = vld [vmem:[%s2 + $0x2f4] sm:$0xf]
    %v241 = vld [vmem:[%s2 + $0x2f8] sm:$0xf]
    %v242 = vld [vmem:[%s2 + $0x2fc] sm:$0xf]
    %v267 = vunpack.c.l.b16 %v27
    %v268 = vunpack.c.h.b16 %v27
    %v269 = vunpack.c.l.b16 %v28
    %v270 = vunpack.c.h.b16 %v28
    %v271 = vunpack.c.l.b16 %v29
    %v272 = vunpack.c.h.b16 %v29
    %v273 = vunpack.c.l.b16 %v30
    %v274 = vunpack.c.h.b16 %v30
    %v275 = vunpack.c.l.b16 %v31
    %v276 = vunpack.c.h.b16 %v31
    %v277 = vunpack.c.l.b16 %v32
    %v278 = vunpack.c.h.b16 %v32
    %v279 = vunpack.c.l.b16 %v33
    %v280 = vunpack.c.h.b16 %v33
    %v281 = vunpack.c.l.b16 %v34
    %v282 = vunpack.c.h.b16 %v34
    %v283 = vunpack.c.l.b16 %v35
    %v284 = vunpack.c.h.b16 %v35
    %v285 = vunpack.c.l.b16 %v36
    %v286 = vunpack.c.h.b16 %v36
    %v287 = vunpack.c.l.b16 %v37
    %v288 = vunpack.c.h.b16 %v37
    %v289 = vunpack.c.l.b16 %v38
    %v290 = vunpack.c.h.b16 %v38
    %v291 = vunpack.c.l.b16 %v39
    %v292 = vunpack.c.h.b16 %v39
    %v293 = vunpack.c.l.b16 %v40
    %v294 = vunpack.c.h.b16 %v40
    %v295 = vunpack.c.l.b16 %v41
    %v296 = vunpack.c.h.b16 %v41
    %v297 = vunpack.c.l.b16 %v42
    %v298 = vunpack.c.h.b16 %v42
    %v299 = vunpack.c.l.b16 %v43
    %v300 = vunpack.c.h.b16 %v43
    %v301 = vunpack.c.l.b16 %v44
    %v302 = vunpack.c.h.b16 %v44
    %v303 = vunpack.c.l.b16 %v45
    %v304 = vunpack.c.h.b16 %v45
    %v305 = vunpack.c.l.b16 %v46
    %v306 = vunpack.c.h.b16 %v46
    %v307 = vunpack.c.l.b16 %v47
    %v308 = vunpack.c.h.b16 %v47
    %v309 = vunpack.c.l.b16 %v48
    %v310 = vunpack.c.h.b16 %v48
    %v311 = vunpack.c.l.b16 %v49
    %v312 = vunpack.c.h.b16 %v49
    %v313 = vunpack.c.l.b16 %v50
    %v314 = vunpack.c.h.b16 %v50
    %v315 = vpack.c.b16 %v279, %v267
    %v316 = vpack.c.b16 %v280, %v268
    %v317 = vpack.c.b16 %v281, %v269
    %v318 = vpack.c.b16 %v282, %v270
    %v319 = vpack.c.b16 %v283, %v271
    %v320 = vpack.c.b16 %v284, %v272
    %v321 = vpack.c.b16 %v285, %v273
    %v322 = vpack.c.b16 %v286, %v274
    %v323 = vpack.c.b16 %v287, %v275
    %v324 = vpack.c.b16 %v288, %v276
    %v325 = vpack.c.b16 %v289, %v277
    %v326 = vpack.c.b16 %v290, %v278
    %v327 = vpack.c.b16 %v303, %v291
    %v328 = vpack.c.b16 %v304, %v292
    %v329 = vpack.c.b16 %v305, %v293
    %v330 = vpack.c.b16 %v306, %v294
    %v331 = vpack.c.b16 %v307, %v295
    %v332 = vpack.c.b16 %v308, %v296
    %v333 = vpack.c.b16 %v309, %v297
    %v334 = vpack.c.b16 %v310, %v298
    %v335 = vpack.c.b16 %v311, %v299
    %v336 = vpack.c.b16 %v312, %v300
    %v337 = vpack.c.b16 %v313, %v301
    %v338 = vpack.c.b16 %v314, %v302
    %v555 = vunpack.c.l.b16 %v51
    %v556 = vunpack.c.l.b16 %v52
    %v557 = vunpack.c.l.b16 %v53
    %v558 = vunpack.c.l.b16 %v54
    %v559 = vunpack.c.l.b16 %v55
    %v560 = vunpack.c.l.b16 %v56
    %v561 = vunpack.c.l.b16 %v57
    %v562 = vunpack.c.l.b16 %v58
    %v563 = vunpack.c.l.b16 %v59
    %v564 = vunpack.c.l.b16 %v60
    %v565 = vunpack.c.l.b16 %v61
    %v566 = vunpack.c.l.b16 %v62
    %v567 = vunpack.c.l.b16 %v63
    %v568 = vunpack.c.l.b16 %v64
    %v569 = vunpack.c.l.b16 %v65
    %v570 = vunpack.c.l.b16 %v66
    %v571 = vunpack.c.l.b16 %v67
    %v572 = vunpack.c.l.b16 %v68
    %v573 = vunpack.c.l.b16 %v69
    %v574 = vunpack.c.l.b16 %v70
    %v575 = vunpack.c.l.b16 %v71
    %v576 = vunpack.c.l.b16 %v72
    %v577 = vunpack.c.l.b16 %v73
    %v578 = vunpack.c.l.b16 %v74
    %v579 = vunpack.c.l.b16 %v75
    %v580 = vunpack.c.l.b16 %v76
    %v581 = vunpack.c.l.b16 %v77
    %v582 = vunpack.c.l.b16 %v78
    %v583 = vunpack.c.l.b16 %v79
    %v584 = vunpack.c.l.b16 %v80
    %v585 = vunpack.c.l.b16 %v81
    %v586 = vunpack.c.l.b16 %v82
    %v587 = vunpack.c.l.b16 %v83
    %v588 = vunpack.c.l.b16 %v84
    %v589 = vunpack.c.l.b16 %v85
    %v590 = vunpack.c.l.b16 %v86
    %v591 = vunpack.c.l.b16 %v87
    %v592 = vunpack.c.l.b16 %v88
    %v593 = vunpack.c.l.b16 %v89
    %v594 = vunpack.c.l.b16 %v90
    %v595 = vunpack.c.l.b16 %v91
    %v596 = vunpack.c.l.b16 %v92
    %v597 = vunpack.c.l.b16 %v93
    %v598 = vunpack.c.l.b16 %v94
    %v599 = vunpack.c.l.b16 %v95
    %v600 = vunpack.c.l.b16 %v96
    %v601 = vunpack.c.l.b16 %v97
    %v602 = vunpack.c.l.b16 %v98
    %v603 = vunpack.c.l.b16 %v99
    %v604 = vunpack.c.l.b16 %v100
    %v605 = vunpack.c.l.b16 %v101
    %v606 = vunpack.c.l.b16 %v102
    %v607 = vunpack.c.l.b16 %v103
    %v608 = vunpack.c.l.b16 %v104
    %v609 = vunpack.c.l.b16 %v105
    %v610 = vunpack.c.l.b16 %v106
    %v611 = vunpack.c.l.b16 %v107
    %v612 = vunpack.c.l.b16 %v108
    %v613 = vunpack.c.l.b16 %v109
    %v614 = vunpack.c.l.b16 %v110
    %v615 = vunpack.c.l.b16 %v111
    %v616 = vunpack.c.l.b16 %v112
    %v617 = vunpack.c.l.b16 %v113
    %v618 = vunpack.c.l.b16 %v114
    %v619 = vunpack.c.l.b16 %v115
    %v620 = vunpack.c.l.b16 %v116
    %v621 = vunpack.c.l.b16 %v117
    %v622 = vunpack.c.l.b16 %v118
    %v623 = vunpack.c.l.b16 %v119
    %v624 = vunpack.c.l.b16 %v120
    %v625 = vunpack.c.l.b16 %v121
    %v626 = vunpack.c.l.b16 %v122
    %v627 = vunpack.c.l.b16 %v123
    %v628 = vunpack.c.l.b16 %v124
    %v629 = vunpack.c.l.b16 %v125
    %v630 = vunpack.c.l.b16 %v126
    %v631 = vunpack.c.l.b16 %v127
    %v632 = vunpack.c.l.b16 %v128
    %v633 = vunpack.c.l.b16 %v129
    %v634 = vunpack.c.l.b16 %v130
    %v635 = vunpack.c.l.b16 %v131
    %v636 = vunpack.c.l.b16 %v132
    %v637 = vunpack.c.l.b16 %v133
    %v638 = vunpack.c.l.b16 %v134
    %v639 = vunpack.c.l.b16 %v135
    %v640 = vunpack.c.l.b16 %v136
    %v641 = vunpack.c.l.b16 %v137
    %v642 = vunpack.c.l.b16 %v138
    %v643 = vunpack.c.l.b16 %v139
    %v644 = vunpack.c.l.b16 %v140
    %v645 = vunpack.c.l.b16 %v141
    %v646 = vunpack.c.l.b16 %v142
    %v647 = vunpack.c.l.b16 %v143
    %v648 = vunpack.c.l.b16 %v144
    %v649 = vunpack.c.l.b16 %v145
    %v650 = vunpack.c.l.b16 %v146
    %v651 = vunpack.c.l.b16 %v147
    %v652 = vunpack.c.l.b16 %v148
    %v653 = vunpack.c.l.b16 %v149
    %v654 = vunpack.c.l.b16 %v150
    %v655 = vunpack.c.l.b16 %v151
    %v656 = vunpack.c.l.b16 %v152
    %v657 = vunpack.c.l.b16 %v153
    %v658 = vunpack.c.l.b16 %v154
    %v659 = vunpack.c.l.b16 %v155
    %v660 = vunpack.c.l.b16 %v156
    %v661 = vunpack.c.l.b16 %v157
    %v662 = vunpack.c.l.b16 %v158
    %v663 = vunpack.c.l.b16 %v159
    %v664 = vunpack.c.l.b16 %v160
    %v665 = vunpack.c.l.b16 %v161
    %v666 = vunpack.c.l.b16 %v162
    %v667 = vunpack.c.l.b16 %v163
    %v668 = vunpack.c.l.b16 %v164
    %v669 = vunpack.c.l.b16 %v165
    %v670 = vunpack.c.l.b16 %v166
    %v671 = vunpack.c.l.b16 %v167
    %v672 = vunpack.c.l.b16 %v168
    %v673 = vunpack.c.l.b16 %v169
    %v674 = vunpack.c.l.b16 %v170
    %v675 = vunpack.c.l.b16 %v171
    %v676 = vunpack.c.l.b16 %v172
    %v677 = vunpack.c.l.b16 %v173
    %v678 = vunpack.c.l.b16 %v174
    %v679 = vunpack.c.l.b16 %v175
    %v680 = vunpack.c.l.b16 %v176
    %v681 = vunpack.c.l.b16 %v177
    %v682 = vunpack.c.l.b16 %v178
    %v683 = vunpack.c.l.b16 %v179
    %v684 = vunpack.c.l.b16 %v180
    %v685 = vunpack.c.l.b16 %v181
    %v686 = vunpack.c.l.b16 %v182
    %v687 = vunpack.c.l.b16 %v183
    %v688 = vunpack.c.l.b16 %v184
    %v689 = vunpack.c.l.b16 %v185
    %v690 = vunpack.c.l.b16 %v186
    %v691 = vunpack.c.l.b16 %v187
    %v692 = vunpack.c.l.b16 %v188
    %v693 = vunpack.c.l.b16 %v189
    %v694 = vunpack.c.l.b16 %v190
    %v695 = vunpack.c.l.b16 %v191
    %v696 = vunpack.c.l.b16 %v192
    %v697 = vunpack.c.l.b16 %v193
    %v698 = vunpack.c.l.b16 %v194
    %v699 = vunpack.c.l.b16 %v195
    %v700 = vunpack.c.l.b16 %v196
    %v701 = vunpack.c.l.b16 %v197
    %v702 = vunpack.c.l.b16 %v198
    %v703 = vunpack.c.l.b16 %v199
    %v704 = vunpack.c.l.b16 %v200
    %v705 = vunpack.c.l.b16 %v201
    %v706 = vunpack.c.l.b16 %v202
    %v707 = vunpack.c.l.b16 %v203
    %v708 = vunpack.c.l.b16 %v204
    %v709 = vunpack.c.l.b16 %v205
    %v710 = vunpack.c.l.b16 %v206
    %v711 = vunpack.c.l.b16 %v207
    %v712 = vunpack.c.l.b16 %v208
    %v713 = vunpack.c.l.b16 %v209
    %v714 = vunpack.c.l.b16 %v210
    %v715 = vunpack.c.l.b16 %v211
    %v716 = vunpack.c.l.b16 %v212
    %v717 = vunpack.c.l.b16 %v213
    %v718 = vunpack.c.l.b16 %v214
    %v719 = vunpack.c.l.b16 %v215
    %v720 = vunpack.c.l.b16 %v216
    %v721 = vunpack.c.l.b16 %v217
    %v722 = vunpack.c.l.b16 %v218
    %v723 = vunpack.c.l.b16 %v219
    %v724 = vunpack.c.l.b16 %v220
    %v725 = vunpack.c.l.b16 %v221
    %v726 = vunpack.c.l.b16 %v222
    %v727 = vunpack.c.l.b16 %v223
    %v728 = vunpack.c.l.b16 %v224
    %v729 = vunpack.c.l.b16 %v225
    %v730 = vunpack.c.l.b16 %v226
    %v731 = vunpack.c.l.b16 %v227
    %v732 = vunpack.c.l.b16 %v228
    %v733 = vunpack.c.l.b16 %v229
    %v734 = vunpack.c.l.b16 %v230
    %v735 = vunpack.c.l.b16 %v231
    %v736 = vunpack.c.l.b16 %v232
    %v737 = vunpack.c.l.b16 %v233
    %v738 = vunpack.c.l.b16 %v234
    %v739 = vunpack.c.l.b16 %v235
    %v740 = vunpack.c.l.b16 %v236
    %v741 = vunpack.c.l.b16 %v237
    %v742 = vunpack.c.l.b16 %v238
    %v743 = vunpack.c.l.b16 %v239
    %v744 = vunpack.c.l.b16 %v240
    %v745 = vunpack.c.l.b16 %v241
    %v746 = vunpack.c.l.b16 %v242
    %v747 = vpack.c.b16 %v556, %v555
    %v748 = vpack.c.b16 %v558, %v557
    %v749 = vpack.c.b16 %v560, %v559
    %v750 = vpack.c.b16 %v562, %v561
    %v751 = vpack.c.b16 %v564, %v563
    %v752 = vpack.c.b16 %v566, %v565
    %v753 = vpack.c.b16 %v568, %v567
    %v754 = vpack.c.b16 %v570, %v569
    %v755 = vpack.c.b16 %v572, %v571
    %v756 = vpack.c.b16 %v574, %v573
    %v757 = vpack.c.b16 %v576, %v575
    %v758 = vpack.c.b16 %v578, %v577
    %v759 = vpack.c.b16 %v580, %v579
    %v760 = vpack.c.b16 %v582, %v581
    %v761 = vpack.c.b16 %v584, %v583
    %v762 = vpack.c.b16 %v586, %v585
    %v763 = vpack.c.b16 %v588, %v587
    %v764 = vpack.c.b16 %v590, %v589
    %v765 = vpack.c.b16 %v592, %v591
    %v766 = vpack.c.b16 %v594, %v593
    %v767 = vpack.c.b16 %v596, %v595
    %v768 = vpack.c.b16 %v598, %v597
    %v769 = vpack.c.b16 %v600, %v599
    %v770 = vpack.c.b16 %v602, %v601
    %v771 = vpack.c.b16 %v604, %v603
    %v772 = vpack.c.b16 %v606, %v605
    %v773 = vpack.c.b16 %v608, %v607
    %v774 = vpack.c.b16 %v610, %v609
    %v775 = vpack.c.b16 %v612, %v611
    %v776 = vpack.c.b16 %v614, %v613
    %v777 = vpack.c.b16 %v616, %v615
    %v778 = vpack.c.b16 %v618, %v617
    %v779 = vpack.c.b16 %v620, %v619
    %v780 = vpack.c.b16 %v622, %v621
    %v781 = vpack.c.b16 %v624, %v623
    %v782 = vpack.c.b16 %v626, %v625
    %v783 = vpack.c.b16 %v628, %v627
    %v784 = vpack.c.b16 %v630, %v629
    %v785 = vpack.c.b16 %v632, %v631
    %v786 = vpack.c.b16 %v634, %v633
    %v787 = vpack.c.b16 %v636, %v635
    %v788 = vpack.c.b16 %v638, %v637
    %v789 = vpack.c.b16 %v640, %v639
    %v790 = vpack.c.b16 %v642, %v641
    %v791 = vpack.c.b16 %v644, %v643
    %v792 = vpack.c.b16 %v646, %v645
    %v793 = vpack.c.b16 %v648, %v647
    %v794 = vpack.c.b16 %v650, %v649
    %v795 = vpack.c.b16 %v652, %v651
    %v796 = vpack.c.b16 %v654, %v653
    %v797 = vpack.c.b16 %v656, %v655
    %v798 = vpack.c.b16 %v658, %v657
    %v799 = vpack.c.b16 %v660, %v659
    %v800 = vpack.c.b16 %v662, %v661
    %v801 = vpack.c.b16 %v664, %v663
    %v802 = vpack.c.b16 %v666, %v665
    %v803 = vpack.c.b16 %v668, %v667
    %v804 = vpack.c.b16 %v670, %v669
    %v805 = vpack.c.b16 %v672, %v671
    %v806 = vpack.c.b16 %v674, %v673
    %v807 = vpack.c.b16 %v676, %v675
    %v808 = vpack.c.b16 %v678, %v677
    %v809 = vpack.c.b16 %v680, %v679
    %v810 = vpack.c.b16 %v682, %v681
    %v811 = vpack.c.b16 %v684, %v683
    %v812 = vpack.c.b16 %v686, %v685
    %v813 = vpack.c.b16 %v688, %v687
    %v814 = vpack.c.b16 %v690, %v689
    %v815 = vpack.c.b16 %v692, %v691
    %v816 = vpack.c.b16 %v694, %v693
    %v817 = vpack.c.b16 %v696, %v695
    %v818 = vpack.c.b16 %v698, %v697
    %v819 = vpack.c.b16 %v700, %v699
    %v820 = vpack.c.b16 %v702, %v701
    %v821 = vpack.c.b16 %v704, %v703
    %v822 = vpack.c.b16 %v706, %v705
    %v823 = vpack.c.b16 %v708, %v707
    %v824 = vpack.c.b16 %v710, %v709
    %v825 = vpack.c.b16 %v712, %v711
    %v826 = vpack.c.b16 %v714, %v713
    %v827 = vpack.c.b16 %v716, %v715
    %v828 = vpack.c.b16 %v718, %v717
    %v829 = vpack.c.b16 %v720, %v719
    %v830 = vpack.c.b16 %v722, %v721
    %v831 = vpack.c.b16 %v724, %v723
    %v832 = vpack.c.b16 %v726, %v725
    %v833 = vpack.c.b16 %v728, %v727
    %v834 = vpack.c.b16 %v730, %v729
    %v835 = vpack.c.b16 %v732, %v731
    %v836 = vpack.c.b16 %v734, %v733
    %v837 = vpack.c.b16 %v736, %v735
    %v838 = vpack.c.b16 %v738, %v737
    %v839 = vpack.c.b16 %v740, %v739
    %v840 = vpack.c.b16 %v742, %v741
    %v841 = vpack.c.b16 %v744, %v743
    %v842 = vpack.c.b16 %v746, %v745
    %939 = vmatprep.subr.bf16.mxu0 0
    %940 = vmatpush1.bf16.msra.mxu0 %v754
    %941 = vmatprep.subr.bf16.mxu0 0
    %942 = vmatpush1.bf16.msra.mxu0 %v753
    %943 = vmatprep.subr.bf16.mxu0 0
    %944 = vmatpush1.bf16.msra.mxu0 %v752
    %945 = vmatprep.subr.bf16.mxu0 0
    %946 = vmatpush1.bf16.msra.mxu0 %v751
    %947 = vmatprep.subr.bf16.mxu0 0
    %948 = vmatpush1.bf16.msra.mxu0 %v750
    %949 = vmatprep.subr.bf16.mxu0 0
    %950 = vmatpush1.bf16.msra.mxu0 %v749
    %951 = vmatprep.subr.bf16.mxu0 0
    %952 = vmatpush1.bf16.msra.mxu0 %v748
    %953 = vmatprep.subr.bf16.mxu0 0
    %954 = vmatpush1.bf16.msra.mxu0 %v747
    %955 = vmatprep.subr.bf16.mxu0 0
    %956 = vmatpush2.bf16.msra.mxu0 %v762
    %957 = vmatprep.subr.bf16.mxu0 0
    %958 = vmatpush2.bf16.msra.mxu0 %v761
    %959 = vmatprep.subr.bf16.mxu0 0
    %960 = vmatpush2.bf16.msra.mxu0 %v760
    %961 = vmatprep.subr.bf16.mxu0 0
    %962 = vmatpush2.bf16.msra.mxu0 %v759
    %963 = vmatprep.subr.bf16.mxu0 0
    %964 = vmatpush2.bf16.msra.mxu0 %v758
    %965 = vmatprep.subr.bf16.mxu0 0
    %966 = vmatpush2.bf16.msra.mxu0 %v757
    %967 = vmatprep.subr.bf16.mxu0 0
    %968 = vmatpush2.bf16.msra.mxu0 %v756
    %969 = vmatprep.subr.bf16.mxu0 0
    %970 = vmatpush2.bf16.msra.mxu0 %v755
    %971 = vmatprep.mubr.bf16.mxu0 %v316
    %972 = vmatmul.mubr.bf16.gmra.mxu0 %v315
    %v973 = vpop.f32.mrf.mxu0
    %v974 = vadd.f32 0.0, %v973
    %v975 = vpop.f32.mrf.mxu0
    %v976 = vpop.f32.mrf.mxu0
    %v977 = vadd.f32 0.0, %v976
    %v978 = vpop.f32.mrf.mxu0
    %979 = vmatprep.mubr.bf16.mxu0 %v328
    %980 = vmatmul.mubr.bf16.gmra.mxu0 %v327
    %v981 = vpop.f32.mrf.mxu0
    %v982 = vadd.f32 0.0, %v981
    %v983 = vpop.f32.mrf.mxu0
    %v984 = vpop.f32.mrf.mxu0
    %v985 = vadd.f32 0.0, %v984
    %v986 = vpop.f32.mrf.mxu0
    %987 = vdwg.mxu0
    %988 = vmatprep.subr.bf16.mxu0 0
    %989 = vmatpush1.bf16.msra.mxu0 %v770
    %990 = vmatprep.subr.bf16.mxu0 0
    %991 = vmatpush1.bf16.msra.mxu0 %v769
    %992 = vmatprep.subr.bf16.mxu0 0
    %993 = vmatpush1.bf16.msra.mxu0 %v768
    %994 = vmatprep.subr.bf16.mxu0 0
    %995 = vmatpush1.bf16.msra.mxu0 %v767
    %996 = vmatprep.subr.bf16.mxu0 0
    %997 = vmatpush1.bf16.msra.mxu0 %v766
    %998 = vmatprep.subr.bf16.mxu0 0
    %999 = vmatpush1.bf16.msra.mxu0 %v765
    %1000 = vmatprep.subr.bf16.mxu0 0
    %1001 = vmatpush1.bf16.msra.mxu0 %v764
    %1002 = vmatprep.subr.bf16.mxu0 0
    %1003 = vmatpush1.bf16.msra.mxu0 %v763
    %1004 = vmatprep.subr.bf16.mxu0 0
    %1005 = vmatpush2.bf16.msra.mxu0 %v778
    %1006 = vmatprep.subr.bf16.mxu0 0
    %1007 = vmatpush2.bf16.msra.mxu0 %v777
    %1008 = vmatprep.subr.bf16.mxu0 0
    %1009 = vmatpush2.bf16.msra.mxu0 %v776
    %1010 = vmatprep.subr.bf16.mxu0 0
    %1011 = vmatpush2.bf16.msra.mxu0 %v775
    %1012 = vmatprep.subr.bf16.mxu0 0
    %1013 = vmatpush2.bf16.msra.mxu0 %v774
    %1014 = vmatprep.subr.bf16.mxu0 0
    %1015 = vmatpush2.bf16.msra.mxu0 %v773
    %1016 = vmatprep.subr.bf16.mxu0 0
    %1017 = vmatpush2.bf16.msra.mxu0 %v772
    %1018 = vmatprep.subr.bf16.mxu0 0
    %1019 = vmatpush2.bf16.msra.mxu0 %v771
    %1020 = vmatprep.mubr.bf16.mxu0 %v318
    %1021 = vmatmul.mubr.bf16.gmra.mxu0 %v317
    %v1022 = vpop.f32.mrf.mxu0
    %v1023 = vadd.f32 %v974, %v1022
    %v1024 = vpop.f32.mrf.mxu0
    %v1025 = vpop.f32.mrf.mxu0
    %v1026 = vadd.f32 %v977, %v1025
    %v1027 = vpop.f32.mrf.mxu0
    %1028 = vmatprep.mubr.bf16.mxu0 %v330
    %1029 = vmatmul.mubr.bf16.gmra.mxu0 %v329
    %v1030 = vpop.f32.mrf.mxu0
    %v1031 = vadd.f32 %v982, %v1030
    %v1032 = vpop.f32.mrf.mxu0
    %v1033 = vpop.f32.mrf.mxu0
    %v1034 = vadd.f32 %v985, %v1033
    %v1035 = vpop.f32.mrf.mxu0
    %1036 = vdwg.mxu0
    %1037 = vmatprep.subr.bf16.mxu0 0
    %1038 = vmatpush1.bf16.msra.mxu0 %v786
    %1039 = vmatprep.subr.bf16.mxu0 0
    %1040 = vmatpush1.bf16.msra.mxu0 %v785
    %1041 = vmatprep.subr.bf16.mxu0 0
    %1042 = vmatpush1.bf16.msra.mxu0 %v784
    %1043 = vmatprep.subr.bf16.mxu0 0
    %1044 = vmatpush1.bf16.msra.mxu0 %v783
    %1045 = vmatprep.subr.bf16.mxu0 0
    %1046 = vmatpush1.bf16.msra.mxu0 %v782
    %1047 = vmatprep.subr.bf16.mxu0 0
    %1048 = vmatpush1.bf16.msra.mxu0 %v781
    %1049 = vmatprep.subr.bf16.mxu0 0
    %1050 = vmatpush1.bf16.msra.mxu0 %v780
    %1051 = vmatprep.subr.bf16.mxu0 0
    %1052 = vmatpush1.bf16.msra.mxu0 %v779
    %1053 = vmatprep.subr.bf16.mxu0 0
    %1054 = vmatpush2.bf16.msra.mxu0 %v794
    %1055 = vmatprep.subr.bf16.mxu0 0
    %1056 = vmatpush2.bf16.msra.mxu0 %v793
    %1057 = vmatprep.subr.bf16.mxu0 0
    %1058 = vmatpush2.bf16.msra.mxu0 %v792
    %1059 = vmatprep.subr.bf16.mxu0 0
    %1060 = vmatpush2.bf16.msra.mxu0 %v791
    %1061 = vmatprep.subr.bf16.mxu0 0
    %1062 = vmatpush2.bf16.msra.mxu0 %v790
    %1063 = vmatprep.subr.bf16.mxu0 0
    %1064 = vmatpush2.bf16.msra.mxu0 %v789
    %1065 = vmatprep.subr.bf16.mxu0 0
    %1066 = vmatpush2.bf16.msra.mxu0 %v788
    %1067 = vmatprep.subr.bf16.mxu0 0
    %1068 = vmatpush2.bf16.msra.mxu0 %v787
    %1069 = vmatprep.mubr.bf16.mxu0 %v320
    %1070 = vmatmul.mubr.bf16.gmra.mxu0 %v319
    %v1071 = vpop.f32.mrf.mxu0
    %v1072 = vadd.f32 %v1023, %v1071
    %v1073 = vpop.f32.mrf.mxu0
    %v1074 = vpop.f32.mrf.mxu0
    %v1075 = vadd.f32 %v1026, %v1074
    %v1076 = vpop.f32.mrf.mxu0
    %1077 = vmatprep.mubr.bf16.mxu0 %v332
    %1078 = vmatmul.mubr.bf16.gmra.mxu0 %v331
    %v1079 = vpop.f32.mrf.mxu0
    %v1080 = vadd.f32 %v1031, %v1079
    %v1081 = vpop.f32.mrf.mxu0
    %v1082 = vpop.f32.mrf.mxu0
    %v1083 = vadd.f32 %v1034, %v1082
    %v1084 = vpop.f32.mrf.mxu0
    %1085 = vdwg.mxu0
    %1086 = vmatprep.subr.bf16.mxu0 0
    %1087 = vmatpush1.bf16.msra.mxu0 %v802
    %1088 = vmatprep.subr.bf16.mxu0 0
    %1089 = vmatpush1.bf16.msra.mxu0 %v801
    %1090 = vmatprep.subr.bf16.mxu0 0
    %1091 = vmatpush1.bf16.msra.mxu0 %v800
    %1092 = vmatprep.subr.bf16.mxu0 0
    %1093 = vmatpush1.bf16.msra.mxu0 %v799
    %1094 = vmatprep.subr.bf16.mxu0 0
    %1095 = vmatpush1.bf16.msra.mxu0 %v798
    %1096 = vmatprep.subr.bf16.mxu0 0
    %1097 = vmatpush1.bf16.msra.mxu0 %v797
    %1098 = vmatprep.subr.bf16.mxu0 0
    %1099 = vmatpush1.bf16.msra.mxu0 %v796
    %1100 = vmatprep.subr.bf16.mxu0 0
    %1101 = vmatpush1.bf16.msra.mxu0 %v795
    %1102 = vmatprep.subr.bf16.mxu0 0
    %1103 = vmatpush2.bf16.msra.mxu0 %v810
    %1104 = vmatprep.subr.bf16.mxu0 0
    %1105 = vmatpush2.bf16.msra.mxu0 %v809
    %1106 = vmatprep.subr.bf16.mxu0 0
    %1107 = vmatpush2.bf16.msra.mxu0 %v808
    %1108 = vmatprep.subr.bf16.mxu0 0
    %1109 = vmatpush2.bf16.msra.mxu0 %v807
    %1110 = vmatprep.subr.bf16.mxu0 0
    %1111 = vmatpush2.bf16.msra.mxu0 %v806
    %1112 = vmatprep.subr.bf16.mxu0 0
    %1113 = vmatpush2.bf16.msra.mxu0 %v805
    %1114 = vmatprep.subr.bf16.mxu0 0
    %1115 = vmatpush2.bf16.msra.mxu0 %v804
    %1116 = vmatprep.subr.bf16.mxu0 0
    %1117 = vmatpush2.bf16.msra.mxu0 %v803
    %1118 = vmatprep.mubr.bf16.mxu0 %v322
    %1119 = vmatmul.mubr.bf16.gmra.mxu0 %v321
    %v1120 = vpop.f32.mrf.mxu0
    %v1121 = vadd.f32 %v1072, %v1120
    %v1122 = vpop.f32.mrf.mxu0
    %v1123 = vpop.f32.mrf.mxu0
    %v1124 = vadd.f32 %v1075, %v1123
    %v1125 = vpop.f32.mrf.mxu0
    %1126 = vmatprep.mubr.bf16.mxu0 %v334
    %1127 = vmatmul.mubr.bf16.gmra.mxu0 %v333
    %v1128 = vpop.f32.mrf.mxu0
    %v1129 = vadd.f32 %v1080, %v1128
    %v1130 = vpop.f32.mrf.mxu0
    %v1131 = vpop.f32.mrf.mxu0
    %v1132 = vadd.f32 %v1083, %v1131
    %v1133 = vpop.f32.mrf.mxu0
    %1134 = vdwg.mxu0
    %1135 = vmatprep.subr.bf16.mxu0 0
    %1136 = vmatpush1.bf16.msra.mxu0 %v818
    %1137 = vmatprep.subr.bf16.mxu0 0
    %1138 = vmatpush1.bf16.msra.mxu0 %v817
    %1139 = vmatprep.subr.bf16.mxu0 0
    %1140 = vmatpush1.bf16.msra.mxu0 %v816
    %1141 = vmatprep.subr.bf16.mxu0 0
    %1142 = vmatpush1.bf16.msra.mxu0 %v815
    %1143 = vmatprep.subr.bf16.mxu0 0
    %1144 = vmatpush1.bf16.msra.mxu0 %v814
    %1145 = vmatprep.subr.bf16.mxu0 0
    %1146 = vmatpush1.bf16.msra.mxu0 %v813
    %1147 = vmatprep.subr.bf16.mxu0 0
    %1148 = vmatpush1.bf16.msra.mxu0 %v812
    %1149 = vmatprep.subr.bf16.mxu0 0
    %1150 = vmatpush1.bf16.msra.mxu0 %v811
    %1151 = vmatprep.subr.bf16.mxu0 0
    %1152 = vmatpush2.bf16.msra.mxu0 %v826
    %1153 = vmatprep.subr.bf16.mxu0 0
    %1154 = vmatpush2.bf16.msra.mxu0 %v825
    %1155 = vmatprep.subr.bf16.mxu0 0
    %1156 = vmatpush2.bf16.msra.mxu0 %v824
    %1157 = vmatprep.subr.bf16.mxu0 0
    %1158 = vmatpush2.bf16.msra.mxu0 %v823
    %1159 = vmatprep.subr.bf16.mxu0 0
    %1160 = vmatpush2.bf16.msra.mxu0 %v822
    %1161 = vmatprep.subr.bf16.mxu0 0
    %1162 = vmatpush2.bf16.msra.mxu0 %v821
    %1163 = vmatprep.subr.bf16.mxu0 0
    %1164 = vmatpush2.bf16.msra.mxu0 %v820
    %1165 = vmatprep.subr.bf16.mxu0 0
    %1166 = vmatpush2.bf16.msra.mxu0 %v819
    %1167 = vmatprep.mubr.bf16.mxu0 %v324
    %1168 = vmatmul.mubr.bf16.gmra.mxu0 %v323
    %v1169 = vpop.f32.mrf.mxu0
    %v1170 = vadd.f32 %v1121, %v1169
    %v1171 = vpop.f32.mrf.mxu0
    %v1172 = vpop.f32.mrf.mxu0
    %v1173 = vadd.f32 %v1124, %v1172
    %v1174 = vpop.f32.mrf.mxu0
    %1175 = vmatprep.mubr.bf16.mxu0 %v336
    %1176 = vmatmul.mubr.bf16.gmra.mxu0 %v335
    %v1177 = vpop.f32.mrf.mxu0
    %v1178 = vadd.f32 %v1129, %v1177
    %v1179 = vpop.f32.mrf.mxu0
    %v1180 = vpop.f32.mrf.mxu0
    %v1181 = vadd.f32 %v1132, %v1180
    %v1182 = vpop.f32.mrf.mxu0
    %1183 = vdwg.mxu0
    %1184 = vmatprep.subr.bf16.mxu0 0
    %1185 = vmatpush1.bf16.msra.mxu0 %v834
    %1186 = vmatprep.subr.bf16.mxu0 0
    %1187 = vmatpush1.bf16.msra.mxu0 %v833
    %1188 = vmatprep.subr.bf16.mxu0 0
    %1189 = vmatpush1.bf16.msra.mxu0 %v832
    %1190 = vmatprep.subr.bf16.mxu0 0
    %1191 = vmatpush1.bf16.msra.mxu0 %v831
    %1192 = vmatprep.subr.bf16.mxu0 0
    %1193 = vmatpush1.bf16.msra.mxu0 %v830
    %1194 = vmatprep.subr.bf16.mxu0 0
    %1195 = vmatpush1.bf16.msra.mxu0 %v829
    %1196 = vmatprep.subr.bf16.mxu0 0
    %1197 = vmatpush1.bf16.msra.mxu0 %v828
    %1198 = vmatprep.subr.bf16.mxu0 0
    %1199 = vmatpush1.bf16.msra.mxu0 %v827
    %1200 = vmatprep.subr.bf16.mxu0 0
    %1201 = vmatpush2.bf16.msra.mxu0 %v842
    %1202 = vmatprep.subr.bf16.mxu0 0
    %1203 = vmatpush2.bf16.msra.mxu0 %v841
    %1204 = vmatprep.subr.bf16.mxu0 0
    %1205 = vmatpush2.bf16.msra.mxu0 %v840
    %1206 = vmatprep.subr.bf16.mxu0 0
    %1207 = vmatpush2.bf16.msra.mxu0 %v839
    %1208 = vmatprep.subr.bf16.mxu0 0
    %1209 = vmatpush2.bf16.msra.mxu0 %v838
    %1210 = vmatprep.subr.bf16.mxu0 0
    %1211 = vmatpush2.bf16.msra.mxu0 %v837
    %1212 = vmatprep.subr.bf16.mxu0 0
    %1213 = vmatpush2.bf16.msra.mxu0 %v836
    %1214 = vmatprep.subr.bf16.mxu0 0
    %1215 = vmatpush2.bf16.msra.mxu0 %v835
    %1216 = vmatprep.mubr.bf16.mxu0 %v326
    %1217 = vmatmul.mubr.bf16.gmra.mxu0 %v325
    %v1218 = vpop.f32.mrf.mxu0
    %v1219 = vadd.f32 %v1170, %v1218
    %v1220 = vpop.f32.mrf.mxu0
    %v1221 = vpop.f32.mrf.mxu0
    %v1222 = vadd.f32 %v1173, %v1221
    %v1223 = vpop.f32.mrf.mxu0
    %1224 = vmatprep.mubr.bf16.mxu0 %v338
    %1225 = vmatmul.mubr.bf16.gmra.mxu0 %v337
    %v1226 = vpop.f32.mrf.mxu0
    %v1227 = vadd.f32 %v1178, %v1226
    %v1228 = vpop.f32.mrf.mxu0
    %v1229 = vpop.f32.mrf.mxu0
    %v1230 = vadd.f32 %v1181, %v1229
    %v1231 = vpop.f32.mrf.mxu0
    %1232 = vdwg.mxu0
    %v1233 = vpack.c.bf16 %v1222, %v1219
    %v1234 = vpack.c.bf16 %v1230, %v1227
    %v1235 = vlaneseq
    %v1236 = vshrl.u32 %v1235, 7
    %v1237 = vsub.s32 1, %v1236
    %v1238 = vrot.slane %v25, %v1237
    %v1243 = vunpack.c.l.b16 %v19
    %v1244 = vunpack.c.l.b16 %v20
    %v1245 = vunpack.c.l.b16 %v21
    %v1246 = vunpack.c.l.b16 %v22
    %v1247 = vpack.c.b16 %v1244, %v1243
    %v1248 = vpack.c.b16 %v1246, %v1245
    %vm1249 = vcmask 261120
    %v1251 = vsel %vm1249, %v1247, 0
    %v1254 = vsel %vm1249, %v1248, 0
    %1256 = vmatprep.subr.bf16.mxu0 0
    %1257 = vmatpush1.bf16.msra.mxu0 0
    %1258 = vmatprep.subr.bf16.mxu0 0
    %1259 = vmatpush1.bf16.msra.mxu0 0
    %1260 = vmatprep.subr.bf16.mxu0 0
    %1261 = vmatpush1.bf16.msra.mxu0 0
    %1262 = vmatprep.subr.bf16.mxu0 0
    %1263 = vmatpush1.bf16.msra.mxu0 0
    %1264 = vmatprep.subr.bf16.mxu0 0
    %1265 = vmatpush1.bf16.msra.mxu0 0
    %1266 = vmatprep.subr.bf16.mxu0 0
    %1267 = vmatpush1.bf16.msra.mxu0 0
    %1268 = vmatprep.subr.bf16.mxu0 0
    %1269 = vmatpush1.bf16.msra.mxu0 %v1234
    %1270 = vmatprep.subr.bf16.mxu0 0
    %1271 = vmatpush1.bf16.msra.mxu0 %v1233
    %1272 = vmatprep.subr.bf16.mxu0 0
    %1273 = vmatpush2.bf16.msra.mxu0 0
    %1274 = vmatprep.subr.bf16.mxu0 0
    %1275 = vmatpush2.bf16.msra.mxu0 0
    %1276 = vmatprep.subr.bf16.mxu0 0
    %1277 = vmatpush2.bf16.msra.mxu0 0
    %1278 = vmatprep.subr.bf16.mxu0 0
    %1279 = vmatpush2.bf16.msra.mxu0 0
    %1280 = vmatprep.subr.bf16.mxu0 0
    %1281 = vmatpush2.bf16.msra.mxu0 0
    %1282 = vmatprep.subr.bf16.mxu0 0
    %1283 = vmatpush2.bf16.msra.mxu0 0
    %1284 = vmatprep.subr.bf16.mxu0 0
    %1285 = vmatpush2.bf16.msra.mxu0 0
    %1286 = vmatprep.subr.bf16.mxu0 0
    %1287 = vmatpush2.bf16.msra.mxu0 0
    %1288 = vmatprep.mubr.bf16.mxu0 0
    %1289 = vmatmul.mubr.bf16.gmra.mxu0 %v1251
    %v1290 = vpop.f32.mrf.mxu0
    %v1291 = vadd.f32 %v1238, %v1290
    %v1292 = vpop.f32.mrf.mxu0
    %v1293 = vpop.f32.mrf.mxu0
    %v1294 = vadd.f32 %v1238, %v1293
    %v1295 = vpop.f32.mrf.mxu0
    %1296 = vmatprep.mubr.bf16.mxu0 0
    %1297 = vmatmul.mubr.bf16.gmra.mxu0 %v1254
    %v1298 = vpop.f32.mrf.mxu0
    %v1299 = vadd.f32 %v1238, %v1298
    %v1300 = vpop.f32.mrf.mxu0
    %v1301 = vpop.f32.mrf.mxu0
    %v1302 = vadd.f32 %v1238, %v1301
    %v1303 = vpop.f32.mrf.mxu0
    %1304 = vdwg.mxu0
    %v1305 = vmax.f32 %v1291, 0.0
    %v1306 = vmax.f32 %v1294, 0.0
    %v1307 = vmax.f32 %v1299, 0.0
    %v1308 = vmax.f32 %v1302, 0.0
    %v1309 = vpack.c.bf16 %v1306, %v1305
    %v1310 = vpack.c.bf16 %v1308, %v1307
    %vm1311 = vcmask 130048
    %v1313 = vsel %vm1311, %v1309, 0
    %v1316 = vsel %vm1311, %v1310, 0
    %1318 = vmatprep.subr.bf16.mxu0 0
    %1319 = vmatpush1.bf16.msra.mxu0 0
    %1320 = vmatprep.subr.bf16.mxu0 0
    %1321 = vmatpush1.bf16.msra.mxu0 0
    %1322 = vmatprep.subr.bf16.mxu0 0
    %1323 = vmatpush1.bf16.msra.mxu0 0
    %1324 = vmatprep.subr.bf16.mxu0 0
    %1325 = vmatpush1.bf16.msra.mxu0 0
    %1326 = vmatprep.subr.bf16.mxu0 0
    %1327 = vmatpush1.bf16.msra.mxu0 0
    %1328 = vmatprep.subr.bf16.mxu0 0
    %1329 = vmatpush1.bf16.msra.mxu0 0
    %1330 = vmatprep.subr.bf16.mxu0 0
    %1331 = vmatpush1.bf16.msra.mxu0 0
    %1332 = vmatprep.subr.bf16.mxu0 0
    %1333 = vmatpush1.bf16.msra.mxu0 %v26
    %1334 = vmatprep.subr.bf16.mxu0 0
    %1335 = vmatpush2.bf16.msra.mxu0 0
    %1336 = vmatprep.subr.bf16.mxu0 0
    %1337 = vmatpush2.bf16.msra.mxu0 0
    %1338 = vmatprep.subr.bf16.mxu0 0
    %1339 = vmatpush2.bf16.msra.mxu0 0
    %1340 = vmatprep.subr.bf16.mxu0 0
    %1341 = vmatpush2.bf16.msra.mxu0 0
    %1342 = vmatprep.subr.bf16.mxu0 0
    %1343 = vmatpush2.bf16.msra.mxu0 0
    %1344 = vmatprep.subr.bf16.mxu0 0
    %1345 = vmatpush2.bf16.msra.mxu0 0
    %1346 = vmatprep.subr.bf16.mxu0 0
    %1347 = vmatpush2.bf16.msra.mxu0 0
    %1348 = vmatprep.subr.bf16.mxu0 0
    %1349 = vmatpush2.bf16.msra.mxu0 0
    %1350 = vmatprep.mubr.bf16.mxu0 0
    %1351 = vmatmul.mubr.bf16.gmra.mxu0 %v1313
    %v1352 = vpop.f32.mrf.mxu0
    %v1353 = vadd.f32 0.0, %v1352
    %v1354 = vpop.f32.mrf.mxu0
    %v1355 = vpop.f32.mrf.mxu0
    %v1356 = vadd.f32 0.0, %v1355
    %v1357 = vpop.f32.mrf.mxu0
    %1358 = vmatprep.mubr.bf16.mxu0 0
    %1359 = vmatmul.mubr.bf16.gmra.mxu0 %v1316
    %v1360 = vpop.f32.mrf.mxu0
    %v1361 = vadd.f32 0.0, %v1360
    %v1362 = vpop.f32.mrf.mxu0
    %v1363 = vpop.f32.mrf.mxu0
    %v1364 = vadd.f32 0.0, %v1363
    %v1365 = vpop.f32.mrf.mxu0
    %1366 = vdwg.mxu0
    %v1367 = vpack.c.bf16 %v1356, %v1353
    %v1368 = vpack.c.bf16 %v1364, %v1361
    %v1369 = vlaneseq
    %v1370 = vshrl.u32 %v1369, 7
    %v1371 = vsub.s32 0, %v1370
    %v1372 = vrot.slane %v25, %v1371
    %1373 = vmatprep.subr.bf16.mxu0 0
    %1374 = vmatpush1.bf16.msra.mxu0 0
    %1375 = vmatprep.subr.bf16.mxu0 0
    %1376 = vmatpush1.bf16.msra.mxu0 0
    %1377 = vmatprep.subr.bf16.mxu0 0
    %1378 = vmatpush1.bf16.msra.mxu0 0
    %1379 = vmatprep.subr.bf16.mxu0 0
    %1380 = vmatpush1.bf16.msra.mxu0 0
    %1381 = vmatprep.subr.bf16.mxu0 0
    %1382 = vmatpush1.bf16.msra.mxu0 0
    %1383 = vmatprep.subr.bf16.mxu0 0
    %1384 = vmatpush1.bf16.msra.mxu0 0
    %1385 = vmatprep.subr.bf16.mxu0 0
    %1386 = vmatpush1.bf16.msra.mxu0 %v1368
    %1387 = vmatprep.subr.bf16.mxu0 0
    %1388 = vmatpush1.bf16.msra.mxu0 %v1367
    %1389 = vmatprep.subr.bf16.mxu0 0
    %1390 = vmatpush2.bf16.msra.mxu0 0
    %1391 = vmatprep.subr.bf16.mxu0 0
    %1392 = vmatpush2.bf16.msra.mxu0 0
    %1393 = vmatprep.subr.bf16.mxu0 0
    %1394 = vmatpush2.bf16.msra.mxu0 0
    %1395 = vmatprep.subr.bf16.mxu0 0
    %1396 = vmatpush2.bf16.msra.mxu0 0
    %1397 = vmatprep.subr.bf16.mxu0 0
    %1398 = vmatpush2.bf16.msra.mxu0 0
    %1399 = vmatprep.subr.bf16.mxu0 0
    %1400 = vmatpush2.bf16.msra.mxu0 0
    %1401 = vmatprep.subr.bf16.mxu0 0
    %1402 = vmatpush2.bf16.msra.mxu0 0
    %1403 = vmatprep.subr.bf16.mxu0 0
    %1404 = vmatpush2.bf16.msra.mxu0 0
    %1405 = vmatprep.mubr.bf16.mxu0 0
    %1406 = vmatmul.mubr.bf16.gmra.mxu0 %v1251
    %v1407 = vpop.f32.mrf.mxu0
    %v1408 = vadd.f32 %v1372, %v1407
    %v1409 = vpop.f32.mrf.mxu0
    %v1410 = vpop.f32.mrf.mxu0
    %v1411 = vadd.f32 %v1372, %v1410
    %v1412 = vpop.f32.mrf.mxu0
    %1413 = vmatprep.mubr.bf16.mxu0 0
    %1414 = vmatmul.mubr.bf16.gmra.mxu0 %v1254
    %v1415 = vpop.f32.mrf.mxu0
    %v1416 = vadd.f32 %v1372, %v1415
    %v1417 = vpop.f32.mrf.mxu0
    %v1418 = vpop.f32.mrf.mxu0
    %v1419 = vadd.f32 %v1372, %v1418
    %v1420 = vpop.f32.mrf.mxu0
    %1421 = vdwg.mxu0
    %1422 = vst [vmem:[#allocation2] sm:$0xff] %v1408
    %1423 = vst [vmem:[#allocation2 + $0x8] sm:$0xff] %v1411
    %1424 = vst [vmem:[#allocation2 + $0x10] sm:$0xff] %v1416
    %1425 = vst [vmem:[#allocation2 + $0x18] sm:$0xff] %v1419
    // Predicated region
    $region18: #{tpu_custom_call.1} parent=1 // pred_check
      _
    $region19: #{tpu_custom_call.1} parent=1 // pred_check_branch
      %1427 = sbr.rel (0) target = $region21
    $region20: #{tpu_custom_call.1} parent=1 // pred_region
      %s1429 = ssub.s32 512, 512
      %1430 = vsyncadd [#allocation3], %s1429
      %s1431 = sshll.u32 [#allocation2], 4
      %s1432 = int_to_ptr.vmem [resolvable:$true] %s1431
      %1437 = dma.vmem_to_hbm [thread:$0]  %s1432, 512, %s4, [#allocation3], 128, 128, 8
    $region21: #{tpu_custom_call.1} parent=1 // pred_fallthru
      _
    // Predicated region
    $region22: #{tpu_custom_call.1} parent=1 // pred_check
      _
    $region23: #{tpu_custom_call.1} parent=1 // pred_check_branch
      %1439 = sbr.rel (0) target = $region25
    $region24: #{tpu_custom_call.1} parent=1 // pred_region
      %1440 = dma.done [#allocation3], 512
    $region25: #{tpu_custom_call.1} parent=1 // pred_fallthru
      _
    %1441 = vsyncpa [#allocation3], 1

</llo_original>
